<compile_context>
chip_gen: v7x
topology: tpu7x:2x2x1
jax: 0.10.0
libtpu: 0.0.40
codegen_flags: <defaults>
</compile_context>

<pallas_src>
import math

import jax
import jax.numpy as jnp
from jax.experimental import pallas as pl
from jax.experimental.pallas import tpu as pltpu


def _round_up(v, m):
    return ((v + m - 1) // m) * m


def _noisy_linear_kernel(x_ref, w_mu_ref, w_sig_ref, eps_i_ref, eps_j_ref,
                         b_ref, o_ref, acc_ref):
    """Training path: y = x @ (mu_w + sig_w * outer(eps_j, eps_i)).T + b.

    Weights arrive pre-transposed as (tk, tn) tiles of the (K, N)-layout
    matrices; eps_i is a (tk, 1) column, eps_j a (1, tn) row, so the noisy
    weight tile is built directly in MXU-ready (K, N) layout.
    """
    k = pl.program_id(2)

    @pl.when(k == 0)
    def _():
        acc_ref[...] = jnp.zeros_like(acc_ref)

    eps_w = eps_i_ref[...] * eps_j_ref[...]              # (tk,1)*(1,tn) -> (tk,tn)
    w_t = w_mu_ref[...] + w_sig_ref[...] * eps_w          # noisy W^T tile
    acc_ref[...] += jnp.dot(x_ref[...], w_t,
                            preferred_element_type=jnp.float32)

    @pl.when(k == pl.num_programs(2) - 1)
    def _():
        o_ref[...] = (acc_ref[...] + b_ref[...]).astype(o_ref.dtype)


def _plain_linear_kernel(x_ref, w_mu_ref, b_ref, o_ref, acc_ref):
    """Eval path: y = x @ mu_w.T + mu_b (no sigma / noise HBM traffic)."""
    k = pl.program_id(2)

    @pl.when(k == 0)
    def _():
        acc_ref[...] = jnp.zeros_like(acc_ref)

    acc_ref[...] += jnp.dot(x_ref[...], w_mu_ref[...],
                            preferred_element_type=jnp.float32)

    @pl.when(k == pl.num_programs(2) - 1)
    def _():
        o_ref[...] = (acc_ref[...] + b_ref[...]).astype(o_ref.dtype)


def factorized_noisy_linear(x, mu_w, sig_w, mu_b, sig_b, eps_i, eps_j,
                            is_training=True, compute_dtype=None,
                            tm=None, tn=None, tk=None):
    """x: (B, num_in). mu_w/sig_w: (num_out, num_in). Returns (B, num_out)."""
    B, num_in = x.shape
    num_out = mu_w.shape[0]
    out_dtype = x.dtype
    cdt = compute_dtype if compute_dtype is not None else x.dtype

    # ---- tile sizes --------------------------------------------------------
    # tn (output lanes) and tk (x's last dim) are 128-multiples -> lane-dense,
    # unmasked stores and aligned loads; 256-multiples when the layer is big
    # enough feed the v6e/v7x 256x256 MXU and remain 128-multiples for v5e.
    # tm is an 8-multiple (sublanes).  Double-buffered f32 weight tiles at
    # (tk<=512, tn<=256) stay a few MiB -> safe under v7x's smaller VMEM.
    if tm is None:
        tm = min(256, _round_up(B, 8))
    if tn is None:
        tn = min(256, _round_up(num_out, 128))
    if tk is None:
        tk = min(512, _round_up(num_in, 128))

    M = _round_up(B, tm)
    N = _round_up(num_out, tn)
    K = _round_up(num_in, tk)

    # ---- one-time layout glue (pad + pre-transpose), plain XLA ops ---------
    x_p = jnp.pad(x, ((0, M - B), (0, K - num_in))).astype(cdt)
    w_mu_t = jnp.pad(mu_w.T, ((0, K - num_in), (0, N - num_out))).astype(cdt)

    bias = (mu_b + sig_b * eps_j) if is_training else mu_b
    bias_p = jnp.pad(bias, (0, N - num_out)).reshape(1, N).astype(jnp.float32)

    grid = (M // tm, N // tn, K // tk)
    x_spec = pl.BlockSpec((tm, tk), lambda i, j, k: (i, k))
    w_spec = pl.BlockSpec((tk, tn), lambda i, j, k: (k, j))
    b_spec = pl.BlockSpec((1, tn), lambda i, j, k: (0, j))
    o_spec = pl.BlockSpec((tm, tn), lambda i, j, k: (i, j))
    cparams = pltpu.CompilerParams(
        dimension_semantics=("parallel", "parallel", "arbitrary"))
    scratch = [pltpu.VMEM((tm, tn), jnp.float32)]
    out_shape = jax.ShapeDtypeStruct((M, N), out_dtype)

    if is_training:
        w_sig_t = jnp.pad(sig_w.T,
                          ((0, K - num_in), (0, N - num_out))).astype(cdt)
        eps_i_col = jnp.pad(eps_i, (0, K - num_in)).reshape(K, 1).astype(cdt)
        eps_j_row = jnp.pad(eps_j, (0, N - num_out)).reshape(1, N).astype(cdt)
        ei_spec = pl.BlockSpec((tk, 1), lambda i, j, k: (k, 0))
        ej_spec = pl.BlockSpec((1, tn), lambda i, j, k: (0, j))

        y = pl.pallas_call(
            _noisy_linear_kernel,
            out_shape=out_shape,
            grid=grid,
            in_specs=[x_spec, w_spec, w_spec, ei_spec, ej_spec, b_spec],
            out_specs=o_spec,
            scratch_shapes=scratch,
            compiler_params=cparams,
        )(x_p, w_mu_t, w_sig_t, eps_i_col, eps_j_row, bias_p)
    else:
        # Specialized eval kernel: no sigma_w / eps inputs at all.
        y = pl.pallas_call(
            _plain_linear_kernel,
            out_shape=out_shape,
            grid=grid,
            in_specs=[x_spec, w_spec, b_spec],
            out_specs=o_spec,
            scratch_shapes=scratch,
            compiler_params=cparams,
        )(x_p, w_mu_t, bias_p)

    return y[:B, :num_out]


def reset_noise(key, num_in, num_out):
    """Factorized Gaussian noise: f(z) = sign(z) * sqrt(|z|)."""
    ki, kj = jax.random.split(key)
    zi = jax.random.normal(ki, (num_in,), jnp.float32)
    zj = jax.random.normal(kj, (num_out,), jnp.float32)
    f = lambda z: jnp.sign(z) * jnp.sqrt(jnp.abs(z))
    return f(zi), f(zj)


def init_params(key, num_in, num_out):
    """Deterministic init mirroring reset_parameters()."""
    std = 1.0 / math.sqrt(num_in)
    k1, k2 = jax.random.split(key)
    mu_w = jax.random.uniform(k1, (num_out, num_in), jnp.float32, -std, std)
    mu_b = jax.random.uniform(k2, (num_out,), jnp.float32, -std, std)
    sig_w = jnp.full((num_out, num_in), 0.5 / math.sqrt(num_in), jnp.float32)
    sig_b = jnp.full((num_out,), 0.5 / math.sqrt(num_in), jnp.float32)
    return mu_w, mu_b, sig_w, sig_b


if __name__ == "__main__":
    # TODO(synk): for layers this tiny, fuse into the surrounding MLP head /
    # batch many envs — a standalone pallas_call is launch-overhead dominated.
    num_in, num_out, batch = 32, 64, 8

    key = jax.random.PRNGKey(0)
    k_param, k_noise, k_x = jax.random.split(key, 3)

    mu_w, mu_b, sig_w, sig_b = init_params(k_param, num_in, num_out)
    eps_i, eps_j = reset_noise(k_noise, num_in, num_out)  # forward() resamples noise
    x = jax.random.normal(k_x, (batch, num_in), jnp.float32)

    out_train = factorized_noisy_linear(x, mu_w, sig_w, mu_b, sig_b,
                                        eps_i, eps_j, is_training=True)
    out_eval = factorized_noisy_linear(x, mu_w, sig_w, mu_b, sig_b,
                                       eps_i, eps_j, is_training=False)
    out_train, out_eval = jax.block_until_ready((out_train, out_eval))

    # pure-JAX references
    w_ref = mu_w + sig_w * (eps_j[:, None] * eps_i[None, :])
    b_ref = mu_b + sig_b * eps_j
    ref_train = x @ w_ref.T + b_ref
    ref_eval = x @ mu_w.T + mu_b

    assert out_train.shape == (batch, num_out)
    assert out_eval.shape == (batch, num_out)
    assert jnp.allclose(out_train, ref_train, atol=1e-5, rtol=1e-5)
    assert jnp.allclose(out_eval, ref_eval, atol=1e-5, rtol=1e-5)
    print("KERNEL_OK")
</pallas_src>

<mosaic_0001>
module attributes {stable_mosaic.version = 11 : i64} {
  func.func @_noisy_linear_kernel(%arg0: i32, %arg1: i32, %arg2: i32, %arg3: memref<8x128xf32, #tpu.memory_space<vmem>>, %arg4: memref<128x128xf32, #tpu.memory_space<vmem>>, %arg5: memref<128x128xf32, #tpu.memory_space<vmem>>, %arg6: memref<128x1xf32, #tpu.memory_space<vmem>>, %arg7: memref<1x128xf32, #tpu.memory_space<vmem>>, %arg8: memref<1x128xf32, #tpu.memory_space<vmem>>, %arg9: memref<8x128xf32, #tpu.memory_space<vmem>>, %arg10: memref<8x128xf32, #tpu.memory_space<vmem>>) attributes {dimension_semantics = [#tpu.dimension_semantics<parallel>, #tpu.dimension_semantics<parallel>, #tpu.dimension_semantics<arbitrary>], iteration_bounds = array<i64: 1, 1, 1>, scalar_prefetch = 0 : i64, scratch_operands = 1 : i64, tpu.core_type = #tpu.core_type<tc>, window_params = [{transform_indices = @transform_0, window_bounds = array<i64: 8, 128>}, {transform_indices = @transform_1, window_bounds = array<i64: 128, 128>}, {transform_indices = @transform_2, window_bounds = array<i64: 128, 128>}, {transform_indices = @transform_3, window_bounds = array<i64: 128, 1>}, {transform_indices = @transform_4, window_bounds = array<i64: 1, 128>}, {transform_indices = @transform_5, window_bounds = array<i64: 1, 128>}, {transform_indices = @transform_6, window_bounds = array<i64: 8, 128>}]} {
    %c0_i32 = arith.constant 0 : i32
    %0 = arith.cmpi eq, %arg2, %c0_i32 : i32
    %1 = arith.extui %0 : i1 to i32
    %c0_i32_0 = arith.constant 0 : i32
    %2 = arith.cmpi ne, %1, %c0_i32_0 : i32
    scf.if %2 {
      %cst_16 = arith.constant 0.000000e+00 : f32
      %20 = vector.broadcast %cst_16 : f32 to vector<8x128xf32>
      %c0_17 = arith.constant 0 : index
      %c0_18 = arith.constant 0 : index
      %21 = vector.load %arg10[%c0_17, %c0_18] : memref<8x128xf32, #tpu.memory_space<vmem>>, vector<8x128xf32>
      tpu.vector_store %arg10[%c0_17, %c0_18], %20 {strides = array<i32>} : memref<8x128xf32, #tpu.memory_space<vmem>>, vector<8x128xf32>,
    } else {
    }
    %c0 = arith.constant 0 : index
    %c0_1 = arith.constant 0 : index
    %3 = vector.load %arg6[%c0, %c0_1] : memref<128x1xf32, #tpu.memory_space<vmem>>, vector<128x1xf32>
    %c0_2 = arith.constant 0 : index
    %c0_3 = arith.constant 0 : index
    %4 = vector.load %arg7[%c0_2, %c0_3] : memref<1x128xf32, #tpu.memory_space<vmem>>, vector<1x128xf32>
    %5 = vector.broadcast %3 : vector<128x1xf32> to vector<128x128xf32>
    %6 = vector.broadcast %4 : vector<1x128xf32> to vector<128x128xf32>
    %7 = arith.mulf %5, %6 : vector<128x128xf32>
    %c0_4 = arith.constant 0 : index
    %c0_5 = arith.constant 0 : index
    %8 = vector.load %arg4[%c0_4, %c0_5] : memref<128x128xf32, #tpu.memory_space<vmem>>, vector<128x128xf32>
    %c0_6 = arith.constant 0 : index
    %c0_7 = arith.constant 0 : index
    %9 = vector.load %arg5[%c0_6, %c0_7] : memref<128x128xf32, #tpu.memory_space<vmem>>, vector<128x128xf32>
    %10 = arith.mulf %9, %7 : vector<128x128xf32>
    %11 = arith.addf %8, %10 : vector<128x128xf32>
    %c0_8 = arith.constant 0 : index
    %c0_9 = arith.constant 0 : index
    %12 = vector.load %arg10[%c0_8, %c0_9] : memref<8x128xf32, #tpu.memory_space<vmem>>, vector<8x128xf32>
    %c0_10 = arith.constant 0 : index
    %c0_11 = arith.constant 0 : index
    %13 = vector.load %arg3[%c0_10, %c0_11] : memref<8x128xf32, #tpu.memory_space<vmem>>, vector<8x128xf32>
    %cst = arith.constant dense<0.000000e+00> : vector<8x128xf32>
    %14 = tpu.matmul %13, %11, %cst {dimension_numbers = #tpu.dot_dimension_numbers<[1], [0], [0], [1], [0, 0, 1, 1], [], []>} : vector<8x128xf32>, vector<128x128xf32>, vector<8x128xf32> -> vector<8x128xf32>
    %15 = arith.addf %12, %14 : vector<8x128xf32>
    %c0_12 = arith.constant 0 : index
    %c0_13 = arith.constant 0 : index
    %16 = vector.load %arg10[%c0_12, %c0_13] : memref<8x128xf32, #tpu.memory_space<vmem>>, vector<8x128xf32>
    tpu.vector_store %arg10[%c0_12, %c0_13], %15 {strides = array<i32>} : memref<8x128xf32, #tpu.memory_space<vmem>>, vector<8x128xf32>,
    %c0_i32_14 = arith.constant 0 : i32
    %17 = arith.cmpi eq, %arg2, %c0_i32_14 : i32
    %18 = arith.extui %17 : i1 to i32
    %c0_i32_15 = arith.constant 0 : i32
    %19 = arith.cmpi ne, %18, %c0_i32_15 : i32
    scf.if %19 {
      %c0_16 = arith.constant 0 : index
      %c0_17 = arith.constant 0 : index
      %20 = vector.load %arg10[%c0_16, %c0_17] : memref<8x128xf32, #tpu.memory_space<vmem>>, vector<8x128xf32>
      %c0_18 = arith.constant 0 : index
      %c0_19 = arith.constant 0 : index
      %21 = vector.load %arg8[%c0_18, %c0_19] : memref<1x128xf32, #tpu.memory_space<vmem>>, vector<1x128xf32>
      %22 = vector.broadcast %21 : vector<1x128xf32> to vector<8x128xf32>
      %23 = arith.addf %20, %22 : vector<8x128xf32>
      %c0_20 = arith.constant 0 : index
      %c0_21 = arith.constant 0 : index
      %24 = vector.load %arg9[%c0_20, %c0_21] : memref<8x128xf32, #tpu.memory_space<vmem>>, vector<8x128xf32>
      tpu.vector_store %arg9[%c0_20, %c0_21], %23 {strides = array<i32>} : memref<8x128xf32, #tpu.memory_space<vmem>>, vector<8x128xf32>,
    } else {
    }
    return
  }
  func.func @transform_0(%arg0: i32, %arg1: i32, %arg2: i32) -> (i32, i32) {
    %c0_i32 = arith.constant 0 : i32
    return %arg0, %arg2 : i32, i32
  }
  func.func @transform_1(%arg0: i32, %arg1: i32, %arg2: i32) -> (i32, i32) {
    %c0_i32 = arith.constant 0 : i32
    return %arg2, %arg1 : i32, i32
  }
  func.func @transform_2(%arg0: i32, %arg1: i32, %arg2: i32) -> (i32, i32) {
    %c0_i32 = arith.constant 0 : i32
    return %arg2, %arg1 : i32, i32
  }
  func.func @transform_3(%arg0: i32, %arg1: i32, %arg2: i32) -> (i32, i32) {
    %c0_i32 = arith.constant 0 : i32
    %c0_i32_0 = arith.constant 0 : i32
    return %arg2, %c0_i32 : i32, i32
  }
  func.func @transform_4(%arg0: i32, %arg1: i32, %arg2: i32) -> (i32, i32) {
    %c0_i32 = arith.constant 0 : i32
    %c0_i32_0 = arith.constant 0 : i32
    return %c0_i32, %arg1 : i32, i32
  }
  func.func @transform_5(%arg0: i32, %arg1: i32, %arg2: i32) -> (i32, i32) {
    %c0_i32 = arith.constant 0 : i32
    %c0_i32_0 = arith.constant 0 : i32
    return %c0_i32, %arg1 : i32, i32
  }
  func.func @transform_6(%arg0: i32, %arg1: i32, %arg2: i32) -> (i32, i32) {
    %c0_i32 = arith.constant 0 : i32
    return %arg0, %arg1 : i32, i32
  }
}

</mosaic_0001>

<llo_original>
// kernel: tpu_custom_call.1
$region0: #{tpu_custom_call.1}
  #allocation0 [shape = 'u32[]', space=smem, size = 0x4, offset = 0x4, fixed_abs, tag = 'smem constant byte address 0x4 - core index']
  #allocation1 [shape = 'u32[144,128]{1,0:T(1,128)}', space=vmem, size = 0x12000, scoped, tag = 'internal scratch']
  #allocation2 [shape = 'f32[8,128]{1,0:T(8,128)}', space=vmem, size = 0x1000, scoped, tag = 'scratch operand']
  %s0 = inlined_call_operand.hbm [shape: f32[8,128], index: 0, kind: input, shape index: {}]
  %s1 = inlined_call_operand.vmem [shape: f32[128,128], index: 1, kind: input, shape index: {}]
  %s2 = inlined_call_operand.hbm [shape: f32[128,128], index: 2, kind: input, shape index: {}]
  %s3 = inlined_call_operand.vmem [shape: f32[128,1], index: 3, kind: input, shape index: {}]
  %s4 = inlined_call_operand.vmem [shape: f32[1,128], index: 4, kind: input, shape index: {}]
  %s5 = inlined_call_operand.vmem [shape: f32[1,128], index: 5, kind: input, shape index: {}]
  %s6 = inlined_call_operand.hbm [shape: f32[8,128], index: 6, kind: output, shape index: {}]
  %s7 = sld [smem:[#allocation0]]
  $region50: #{tpu_custom_call.1} parent=0
    _
  %s9 = ssub.s32 1, %s7
  %s10 = scalar_select 0, %s9, %s7
  $region1: #{tpu_custom_call.1} parent=0
    #allocation3 [shape = 'u8[4096]{0}', space=vmem, size = 0x1000, scoped, tag = 'input window, operand 0, single buffered']
    #allocation4 [shape = 's32[1]{0}', space=sflag, size = 0x4, scoped, tag = 'scoped memory for tpu_custom_call.1']
    #allocation5 [shape = 's32[1]{0}', space=sflag, size = 0x4, scoped, tag = 'scoped memory for tpu_custom_call.1']
    #allocation6 [shape = 'u8[65536]{0}', space=vmem, size = 0x10000, scoped, tag = 'input window, operand 2, single buffered']
    #allocation7 [shape = 's32[1]{0}', space=sflag, size = 0x4, scoped, tag = 'scoped memory for tpu_custom_call.1']
    #allocation8 [shape = 'u8[4096]{0}', space=vmem, size = 0x1000, scoped, tag = 'output window, operand 0, single buffered']
    %11 = vsyncpa [#allocation4], 0
    %12 = vsyncpa [#allocation7], 0
    %13 = vsyncpa [#allocation5], 0
    // Predicated region
    $region2: #{tpu_custom_call.1} parent=1 // pred_check
      _
    $region3: #{tpu_custom_call.1} parent=1 // pred_check_branch
      %15 = sbr.rel (0) target = $region5
    $region4: #{tpu_custom_call.1} parent=1 // pred_region
      %s17 = ssub.s32 128, 128
      %18 = vsyncadd [#allocation4], %s17
      %s20 = sshll.u32 [#allocation3], 4
      %s21 = int_to_ptr.vmem [resolvable:$true] %s20
      %23 = dma.hbm_to_vmem [thread:$0]  %s0, 128, %s21, [#allocation4]
    $region5: #{tpu_custom_call.1} parent=1 // pred_fallthru
      _
    // Predicated region
    $region6: #{tpu_custom_call.1} parent=1 // pred_check
      _
    $region7: #{tpu_custom_call.1} parent=1 // pred_check_branch
      %25 = sbr.rel (0) target = $region9
    $region8: #{tpu_custom_call.1} parent=1 // pred_region
      _
    $region9: #{tpu_custom_call.1} parent=1 // pred_fallthru
      _
    // Predicated region
    $region10: #{tpu_custom_call.1} parent=1 // pred_check
      _
    $region11: #{tpu_custom_call.1} parent=1 // pred_check_branch
      %27 = sbr.rel (0) target = $region13
    $region12: #{tpu_custom_call.1} parent=1 // pred_region
      %s29 = ssub.s32 2048, 2048
      %30 = vsyncadd [#allocation7], %s29
      %s31 = sshll.u32 [#allocation6], 4
      %s32 = int_to_ptr.vmem [resolvable:$true] %s31
      %37 = dma.hbm_to_vmem [thread:$0]  %s2, 2048, %s32, [#allocation7], 128, 128, 8
    $region13: #{tpu_custom_call.1} parent=1 // pred_fallthru
      _
    // Predicated region
    $region14: #{tpu_custom_call.1} parent=1 // pred_check
      _
    $region15: #{tpu_custom_call.1} parent=1 // pred_check_branch
      %39 = sbr.rel (0) target = $region17
    $region16: #{tpu_custom_call.1} parent=1 // pred_region
      _
    $region17: #{tpu_custom_call.1} parent=1 // pred_fallthru
      _
    // Predicated region
    $region18: #{tpu_custom_call.1} parent=1 // pred_check
      _
    $region19: #{tpu_custom_call.1} parent=1 // pred_check_branch
      %41 = sbr.rel (0) target = $region21
    $region20: #{tpu_custom_call.1} parent=1 // pred_region
      _
    $region21: #{tpu_custom_call.1} parent=1 // pred_fallthru
      _
    // Predicated region
    $region22: #{tpu_custom_call.1} parent=1 // pred_check
      _
    $region23: #{tpu_custom_call.1} parent=1 // pred_check_branch
      %43 = sbr.rel (0) target = $region25
    $region24: #{tpu_custom_call.1} parent=1 // pred_region
      _
    $region25: #{tpu_custom_call.1} parent=1 // pred_fallthru
      _
    // Predicated region
    $region26: #{tpu_custom_call.1} parent=1 // pred_check
      _
    $region27: #{tpu_custom_call.1} parent=1 // pred_check_branch
      %45 = sbr.rel (0) target = $region29
    $region28: #{tpu_custom_call.1} parent=1 // pred_region
      %46 = dma.done [#allocation4], 128
    $region29: #{tpu_custom_call.1} parent=1 // pred_fallthru
      _
    // Predicated region
    $region30: #{tpu_custom_call.1} parent=1 // pred_check
      _
    $region31: #{tpu_custom_call.1} parent=1 // pred_check_branch
      %48 = sbr.rel (0) target = $region33
    $region32: #{tpu_custom_call.1} parent=1 // pred_region
      %49 = dma.done [#allocation7], 2048
    $region33: #{tpu_custom_call.1} parent=1 // pred_fallthru
      _
    %p50 = scmp.eq.s32.totalorder 0, 0
    // Predicated region
    $region34: #{tpu_custom_call.1} parent=1 // pred_check
      %p51 = pneg %p50
    $region35: #{tpu_custom_call.1} parent=1 // pred_check_branch
      %53 = sbr.rel (%p51) target = $region37
    $region36: #{tpu_custom_call.1} parent=1 // pred_region
      %54 = vst [vmem:[#allocation2] sm:$0xff] 0.0
    $region37: #{tpu_custom_call.1} parent=1 // pred_fallthru
      _
    %v55 = vld [vmem:[%s3] sm:$0xff]
    %v56 = vld [vmem:[%s3 + $0x8] sm:$0xff]
    %v57 = vld [vmem:[%s3 + $0x10] sm:$0xff]
    %v58 = vld [vmem:[%s3 + $0x18] sm:$0xff]
    %v59 = vld [vmem:[%s3 + $0x20] sm:$0xff]
    %v60 = vld [vmem:[%s3 + $0x28] sm:$0xff]
    %v61 = vld [vmem:[%s3 + $0x30] sm:$0xff]
    %v62 = vld [vmem:[%s3 + $0x38] sm:$0xff]
    %v63 = vld [vmem:[%s3 + $0x40] sm:$0xff]
    %v64 = vld [vmem:[%s3 + $0x48] sm:$0xff]
    %v65 = vld [vmem:[%s3 + $0x50] sm:$0xff]
    %v66 = vld [vmem:[%s3 + $0x58] sm:$0xff]
    %v67 = vld [vmem:[%s3 + $0x60] sm:$0xff]
    %v68 = vld [vmem:[%s3 + $0x68] sm:$0xff]
    %v69 = vld [vmem:[%s3 + $0x70] sm:$0xff]
    %v70 = vld [vmem:[%s3 + $0x78] sm:$0xff]
    %v71 = vld [vmem:[%s4] sm:$0x1]
    %73 = vset.pattern.permute.xlu0 0
    %74 = vperm.xlu0 %73, %v55
    %v75 = vpop.permute.xlu0 %74
    %78 = vset.pattern.permute.xlu0 0
    %79 = vperm.xlu0 %78, %v56
    %v80 = vpop.permute.xlu0 %79
    %83 = vset.pattern.permute.xlu0 0
    %84 = vperm.xlu0 %83, %v57
    %v85 = vpop.permute.xlu0 %84
    %88 = vset.pattern.permute.xlu0 0
    %89 = vperm.xlu0 %88, %v58
    %v90 = vpop.permute.xlu0 %89
    %93 = vset.pattern.permute.xlu0 0
    %94 = vperm.xlu0 %93, %v59
    %v95 = vpop.permute.xlu0 %94
    %98 = vset.pattern.permute.xlu0 0
    %99 = vperm.xlu0 %98, %v60
    %v100 = vpop.permute.xlu0 %99
    %103 = vset.pattern.permute.xlu0 0
    %104 = vperm.xlu0 %103, %v61
    %v105 = vpop.permute.xlu0 %104
    %108 = vset.pattern.permute.xlu0 0
    %109 = vperm.xlu0 %108, %v62
    %v110 = vpop.permute.xlu0 %109
    %113 = vset.pattern.permute.xlu0 0
    %114 = vperm.xlu0 %113, %v63
    %v115 = vpop.permute.xlu0 %114
    %118 = vset.pattern.permute.xlu0 0
    %119 = vperm.xlu0 %118, %v64
    %v120 = vpop.permute.xlu0 %119
    %123 = vset.pattern.permute.xlu0 0
    %124 = vperm.xlu0 %123, %v65
    %v125 = vpop.permute.xlu0 %124
    %128 = vset.pattern.permute.xlu0 0
    %129 = vperm.xlu0 %128, %v66
    %v130 = vpop.permute.xlu0 %129
    %133 = vset.pattern.permute.xlu0 0
    %134 = vperm.xlu0 %133, %v67
    %v135 = vpop.permute.xlu0 %134
    %138 = vset.pattern.permute.xlu0 0
    %139 = vperm.xlu0 %138, %v68
    %v140 = vpop.permute.xlu0 %139
    %143 = vset.pattern.permute.xlu0 0
    %144 = vperm.xlu0 %143, %v69
    %v145 = vpop.permute.xlu0 %144
    %148 = vset.pattern.permute.xlu0 0
    %149 = vperm.xlu0 %148, %v70
    %v150 = vpop.permute.xlu0 %149
    %v153 = vlaneseq
    %v154 = vshrl.u32 %v153, 7
    %v155 = vsub.s32 0, %v154
    %v156 = vrot.slane %v71, %v155
    %v158 = vmul.f32 %v75, %v156
    %v159 = vmul.f32 %v80, %v156
    %v160 = vmul.f32 %v85, %v156
    %v161 = vmul.f32 %v90, %v156
    %v162 = vmul.f32 %v95, %v156
    %v163 = vmul.f32 %v100, %v156
    %v164 = vmul.f32 %v105, %v156
    %v165 = vmul.f32 %v110, %v156
    %v166 = vmul.f32 %v115, %v156
    %v167 = vmul.f32 %v120, %v156
    %v168 = vmul.f32 %v125, %v156
    %v169 = vmul.f32 %v130, %v156
    %v170 = vmul.f32 %v135, %v156
    %v171 = vmul.f32 %v140, %v156
    %v172 = vmul.f32 %v145, %v156
    %v173 = vmul.f32 %v150, %v156
    %v174 = vld [vmem:[%s1] sm:$0xff]
    %v175 = vld [vmem:[%s1 + $0x8] sm:$0xff]
    %v176 = vld [vmem:[%s1 + $0x10] sm:$0xff]
    %v177 = vld [vmem:[%s1 + $0x18] sm:$0xff]
    %v178 = vld [vmem:[%s1 + $0x20] sm:$0xff]
    %v179 = vld [vmem:[%s1 + $0x28] sm:$0xff]
    %v180 = vld [vmem:[%s1 + $0x30] sm:$0xff]
    %v181 = vld [vmem:[%s1 + $0x38] sm:$0xff]
    %v182 = vld [vmem:[%s1 + $0x40] sm:$0xff]
    %v183 = vld [vmem:[%s1 + $0x48] sm:$0xff]
    %v184 = vld [vmem:[%s1 + $0x50] sm:$0xff]
    %v185 = vld [vmem:[%s1 + $0x58] sm:$0xff]
    %v186 = vld [vmem:[%s1 + $0x60] sm:$0xff]
    %v187 = vld [vmem:[%s1 + $0x68] sm:$0xff]
    %v188 = vld [vmem:[%s1 + $0x70] sm:$0xff]
    %v189 = vld [vmem:[%s1 + $0x78] sm:$0xff]
    %v190 = vld [vmem:[#allocation6] sm:$0xff]
    %v191 = vld [vmem:[#allocation6 + $0x8] sm:$0xff]
    %v192 = vld [vmem:[#allocation6 + $0x10] sm:$0xff]
    %v193 = vld [vmem:[#allocation6 + $0x18] sm:$0xff]
    %v194 = vld [vmem:[#allocation6 + $0x20] sm:$0xff]
    %v195 = vld [vmem:[#allocation6 + $0x28] sm:$0xff]
    %v196 = vld [vmem:[#allocation6 + $0x30] sm:$0xff]
    %v197 = vld [vmem:[#allocation6 + $0x38] sm:$0xff]
    %v198 = vld [vmem:[#allocation6 + $0x40] sm:$0xff]
    %v199 = vld [vmem:[#allocation6 + $0x48] sm:$0xff]
    %v200 = vld [vmem:[#allocation6 + $0x50] sm:$0xff]
    %v201 = vld [vmem:[#allocation6 + $0x58] sm:$0xff]
    %v202 = vld [vmem:[#allocation6 + $0x60] sm:$0xff]
    %v203 = vld [vmem:[#allocation6 + $0x68] sm:$0xff]
    %v204 = vld [vmem:[#allocation6 + $0x70] sm:$0xff]
    %v205 = vld [vmem:[#allocation6 + $0x78] sm:$0xff]
    %v206 = vmul.f32 %v190, %v158
    %v207 = vmul.f32 %v191, %v159
    %v208 = vmul.f32 %v192, %v160
    %v209 = vmul.f32 %v193, %v161
    %v210 = vmul.f32 %v194, %v162
    %v211 = vmul.f32 %v195, %v163
    %v212 = vmul.f32 %v196, %v164
    %v213 = vmul.f32 %v197, %v165
    %v214 = vmul.f32 %v198, %v166
    %v215 = vmul.f32 %v199, %v167
    %v216 = vmul.f32 %v200, %v168
    %v217 = vmul.f32 %v201, %v169
    %v218 = vmul.f32 %v202, %v170
    %v219 = vmul.f32 %v203, %v171
    %v220 = vmul.f32 %v204, %v172
    %v221 = vmul.f32 %v205, %v173
    %v222 = vadd.f32 %v174, %v206
    %v223 = vadd.f32 %v175, %v207
    %v224 = vadd.f32 %v176, %v208
    %v225 = vadd.f32 %v177, %v209
    %v226 = vadd.f32 %v178, %v210
    %v227 = vadd.f32 %v179, %v211
    %v228 = vadd.f32 %v180, %v212
    %v229 = vadd.f32 %v181, %v213
    %v230 = vadd.f32 %v182, %v214
    %v231 = vadd.f32 %v183, %v215
    %v232 = vadd.f32 %v184, %v216
    %v233 = vadd.f32 %v185, %v217
    %v234 = vadd.f32 %v186, %v218
    %v235 = vadd.f32 %v187, %v219
    %v236 = vadd.f32 %v188, %v220
    %v237 = vadd.f32 %v189, %v221
    %v238 = vld [vmem:[#allocation2] sm:$0xff]
    %v239 = vld [vmem:[#allocation3] sm:$0xff]
    %240 = vmatprep.subr.mxu0 0.0
    %241 = vmatpush1.msra.mxu0 %v222
    %242 = vmatprep.subr.mxu0 0.0
    %243 = vmatpush1.msra.mxu0 %v223
    %244 = vmatprep.subr.mxu0 0.0
    %245 = vmatpush1.msra.mxu0 %v224
    %246 = vmatprep.subr.mxu0 0.0
    %247 = vmatpush1.msra.mxu0 %v225
    %248 = vmatprep.subr.mxu0 0.0
    %249 = vmatpush1.msra.mxu0 %v226
    %250 = vmatprep.subr.mxu0 0.0
    %251 = vmatpush1.msra.mxu0 %v227
    %252 = vmatprep.subr.mxu0 0.0
    %253 = vmatpush1.msra.mxu0 %v228
    %254 = vmatprep.subr.mxu0 0.0
    %255 = vmatpush1.msra.mxu0 %v229
    %256 = vmatprep.subr.mxu0 0.0
    %257 = vmatpush1.msra.mxu0 %v230
    %258 = vmatprep.subr.mxu0 0.0
    %259 = vmatpush1.msra.mxu0 %v231
    %260 = vmatprep.subr.mxu0 0.0
    %261 = vmatpush1.msra.mxu0 %v232
    %262 = vmatprep.subr.mxu0 0.0
    %263 = vmatpush1.msra.mxu0 %v233
    %264 = vmatprep.subr.mxu0 0.0
    %265 = vmatpush1.msra.mxu0 %v234
    %266 = vmatprep.subr.mxu0 0.0
    %267 = vmatpush1.msra.mxu0 %v235
    %268 = vmatprep.subr.mxu0 0.0
    %269 = vmatpush1.msra.mxu0 %v236
    %270 = vmatprep.subr.mxu0 0.0
    %271 = vmatpush1.msra.mxu0 %v237
    %272 = vmatprep.subr.mxu0 0.0
    %273 = vmatpush1.msra.mxu0 0.0
    %274 = vmatprep.subr.mxu0 0.0
    %275 = vmatpush1.msra.mxu0 0.0
    %276 = vmatprep.subr.mxu0 0.0
    %277 = vmatpush1.msra.mxu0 0.0
    %278 = vmatprep.subr.mxu0 0.0
    %279 = vmatpush1.msra.mxu0 0.0
    %280 = vmatprep.subr.mxu0 0.0
    %281 = vmatpush1.msra.mxu0 0.0
    %282 = vmatprep.subr.mxu0 0.0
    %283 = vmatpush1.msra.mxu0 0.0
    %284 = vmatprep.subr.mxu0 0.0
    %285 = vmatpush1.msra.mxu0 0.0
    %286 = vmatprep.subr.mxu0 0.0
    %287 = vmatpush1.msra.mxu0 0.0
    %288 = vmatprep.subr.mxu0 0.0
    %289 = vmatpush1.msra.mxu0 0.0
    %290 = vmatprep.subr.mxu0 0.0
    %291 = vmatpush1.msra.mxu0 0.0
    %292 = vmatprep.subr.mxu0 0.0
    %293 = vmatpush1.msra.mxu0 0.0
    %294 = vmatprep.subr.mxu0 0.0
    %295 = vmatpush1.msra.mxu0 0.0
    %296 = vmatprep.subr.mxu0 0.0
    %297 = vmatpush1.msra.mxu0 0.0
    %298 = vmatprep.subr.mxu0 0.0
    %299 = vmatpush1.msra.mxu0 0.0
    %300 = vmatprep.subr.mxu0 0.0
    %301 = vmatpush1.msra.mxu0 0.0
    %302 = vmatprep.subr.mxu0 0.0
    %303 = vmatpush1.msra.mxu0 0.0
    %304 = vmatprep.mubr.f32.mxu0 0.0
    %305 = vmatmul.mubr.f32.gmra.mrb[0].mxu0 %v239
    %v306 = vpop.f32.mrb[0].mxu0
    %v307 = vadd.f32 0.0, %v306
    %v308 = vpop.f32.mrb[0].mxu0
    %309 = vdwg.mxu0
    %v310 = vadd.f32 %v238, %v307
    %311 = vst [vmem:[#allocation2] sm:$0xff] %v310
    // Predicated region
    $region38: #{tpu_custom_call.1} parent=1 // pred_check
      %p312 = pneg %p50
    $region39: #{tpu_custom_call.1} parent=1 // pred_check_branch
      %314 = sbr.rel (%p312) target = $region41
    $region40: #{tpu_custom_call.1} parent=1 // pred_region
      %v315 = vld [vmem:[#allocation2] sm:$0xff]
      %v316 = vld [vmem:[%s5] sm:$0x1]
      %v318 = vlaneseq
      %v319 = vshrl.u32 %v318, 7
      %v320 = vsub.s32 0, %v319
      %v321 = vrot.slane %v316, %v320
      %v323 = vadd.f32 %v315, %v321
      %324 = vst [vmem:[#allocation8] sm:$0xff] %v323
    $region41: #{tpu_custom_call.1} parent=1 // pred_fallthru
      _
    // Predicated region
    $region42: #{tpu_custom_call.1} parent=1 // pred_check
      _
    $region43: #{tpu_custom_call.1} parent=1 // pred_check_branch
      %326 = sbr.rel (0) target = $region45
    $region44: #{tpu_custom_call.1} parent=1 // pred_region
      %s328 = ssub.s32 128, 128
      %329 = vsyncadd [#allocation5], %s328
      %s331 = sshll.u32 [#allocation8], 4
      %s332 = int_to_ptr.vmem [resolvable:$true] %s331
      %334 = dma.vmem_to_hbm [thread:$0]  %s332, 128, %s6, [#allocation5]
    $region45: #{tpu_custom_call.1} parent=1 // pred_fallthru
      _
    // Predicated region
    $region46: #{tpu_custom_call.1} parent=1 // pred_check
      _
    $region47: #{tpu_custom_call.1} parent=1 // pred_check_branch
      %336 = sbr.rel (0) target = $region49
    $region48: #{tpu_custom_call.1} parent=1 // pred_region
      %337 = dma.done [#allocation5], 128
    $region49: #{tpu_custom_call.1} parent=1 // pred_fallthru
      _
    %338 = vsyncpa [#allocation4], 1
    %339 = vsyncpa [#allocation7], 1
    %340 = vsyncpa [#allocation5], 1

</llo_original>
